<compile_context>
chip_gen: v7x
topology: tpu7x:2x2x1
jax: 0.10.0
libtpu: 0.0.40
codegen_flags: <defaults>
</compile_context>

<pallas_src>
import functools

import jax
import jax.numpy as jnp
from jax.experimental import pallas as pl
from jax.experimental.pallas import tpu as pltpu


def _round_up(x, m):
    return ((x + m - 1) // m) * m


def _cdiv(a, b):
    return (a + b - 1) // b


def _make_dice_kernel(L, TL, chunks_per_split):
    """Kernel accumulating per-row sum(tanh(x/2)*t), sum(t), sum(tanh(x/2))."""

    def kernel(x_ref, t_ref, a_ref, b_ref, c_ref):
        l = pl.program_id(2)

        # Init the resident per-row accumulators on the first spatial chunk.
        @pl.when(l == 0)
        def _():
            a_ref[...] = jnp.zeros_like(a_ref)
            b_ref[...] = jnp.zeros_like(b_ref)
            c_ref[...] = jnp.zeros_like(c_ref)

        x = x_ref[...].astype(jnp.float32)
        t = t_ref[...].astype(jnp.float32)

        # Logical chunk position (independent of the clamped data index):
        # mask the ragged tail instead of padding the inputs in HBM.
        chunk = pl.program_id(0) * chunks_per_split + l
        start = chunk * TL
        lane = jax.lax.broadcasted_iota(jnp.int32, x.shape, 1)
        valid = (start + lane) < L

        # sigmoid(x) = 0.5*(tanh(0.5x) + 1): single EUP push per element; the
        # affine part is applied per-row in the epilogue.
        th = jnp.where(valid, jnp.tanh(0.5 * x), 0.0)
        tv = jnp.where(valid, t, 0.0)

        a_ref[...] += jnp.sum(th * tv, axis=1, keepdims=True)  # sum tanh*t
        b_ref[...] += jnp.sum(tv, axis=1, keepdims=True)       # sum t
        c_ref[...] += jnp.sum(th, axis=1, keepdims=True)       # sum tanh

    return kernel


def dice_loss(inputs, targets, smooth=1.0):
    """Pallas TPU implementation of DiceLoss.forward.

    inputs, targets: (B, C, H, W) arrays (NCHW, same as PyTorch).
    Returns a scalar float32 loss.
    """
    B, C, H, W = inputs.shape
    assert targets.shape == inputs.shape
    N = B * C
    L = H * W

    x = inputs.reshape(N, L)
    t = targets.reshape(N, L)

    # ---- Tile sizing: rows first, then a lane-dense spatial chunk. ----
    min_item = min(x.dtype.itemsize, t.dtype.itemsize)
    max_item = max(x.dtype.itemsize, t.dtype.itemsize)
    sublane = {4: 8, 2: 16, 1: 32}.get(min_item, 8)

    TN = min(_round_up(N, sublane), 256)

    target_tile_bytes = 2 * 1024 * 1024          # per input, per grid step
    elems = max(target_tile_bytes // max_item, 128 * sublane)
    TL = max(128, min(_round_up(L, 128), (elems // TN) // 128 * 128))

    total_chunks = _cdiv(L, TL)
    if total_chunks < 2 and L > 128:
        # Make >= 2 spatial chunks so the parallel split axis can feed both
        # TensorCores on v7x (no-op cost on single-TC v5e/v6e).
        TL = _round_up(_cdiv(L, 2), 128)
        total_chunks = _cdiv(L, TL)

    splits = 2 if total_chunks >= 2 else 1
    cps = _cdiv(total_chunks, splits)            # chunks handled per split

    row_blocks = _cdiv(N, TN)
    N_out = row_blocks * TN                      # pad only the tiny outputs

    grid = (splits, row_blocks, cps)

    def in_map(s, i, l):
        # Clamp fully-out-of-range chunks (ragged split) onto the last real
        # chunk; the in-kernel mask zeroes their contribution.
        return (i, jnp.minimum(s * cps + l, total_chunks - 1))

    out_spec = pl.BlockSpec((pl.Squeezed(), TN, 1), lambda s, i, l: (s, i, 0))
    out_sds = jax.ShapeDtypeStruct((splits, N_out, 1), jnp.float32)

    a, b, c = pl.pallas_call(
        _make_dice_kernel(L, TL, cps),
        out_shape=(out_sds, out_sds, out_sds),
        grid=grid,
        in_specs=[
            pl.BlockSpec((TN, TL), in_map),
            pl.BlockSpec((TN, TL), in_map),
        ],
        out_specs=(out_spec, out_spec, out_spec),
        compiler_params=pltpu.CompilerParams(
            dimension_semantics=("parallel", "parallel", "arbitrary"),
            vmem_limit_bytes=48 * 1024 * 1024,
        ),
    )(x, t)

    # Epilogue: combine the two split halves, drop padded rows, apply the
    # sigmoid affine per row, and reduce to the scalar loss.
    sum_tt = jnp.sum(a[:, :N, 0], axis=0)        # sum(tanh(x/2) * t)
    sum_t = jnp.sum(b[:, :N, 0], axis=0)         # sum(t)
    sum_th = jnp.sum(c[:, :N, 0], axis=0)        # sum(tanh(x/2))

    inter = 0.5 * (sum_tt + sum_t)               # sum(sigmoid(x) * t)
    denom = 0.5 * sum_th + 0.5 * L + sum_t       # sum(sigmoid(x)) + sum(t)
    channel_loss = 1.0 - (2.0 * inter + smooth) / (denom + smooth)
    return jnp.mean(channel_loss)


def dice_loss_ref(inputs, targets, smooth=1.0):
    """Pure-JAX reference mirroring the PyTorch loops."""
    p = jax.nn.sigmoid(inputs.astype(jnp.float32))
    t = targets.astype(jnp.float32)
    inter = jnp.sum(p * t, axis=(2, 3))
    denom = jnp.sum(p, axis=(2, 3)) + jnp.sum(t, axis=(2, 3)) + smooth
    channel_loss = 1.0 - (2.0 * inter + smooth) / denom
    return jnp.mean(channel_loss)


if __name__ == "__main__":
    B, C, H, W = 2, 4, 16, 16
    key = jax.random.PRNGKey(0)
    k1, k2 = jax.random.split(key)

    x = jax.random.normal(k1, (B, C, H, W), dtype=jnp.float32)            # logits
    t = (jax.random.uniform(k2, (B, C, H, W)) > 0.5).astype(jnp.float32)  # binary targets

    loss_fn = jax.jit(functools.partial(dice_loss, smooth=1.0))
    loss = jax.block_until_ready(loss_fn(x, t))

    ref = dice_loss_ref(x, t, smooth=1.0)
    assert jnp.allclose(loss, ref, atol=1e-5, rtol=1e-5), (loss, ref)

    print("KERNEL_OK")
</pallas_src>

<mosaic_0001>
module attributes {stable_mosaic.version = 11 : i64} {
  func.func @kernel(%arg0: i32, %arg1: i32, %arg2: i32, %arg3: memref<8x128xf32, #tpu.memory_space<vmem>>, %arg4: memref<8x128xf32, #tpu.memory_space<vmem>>, %arg5: memref<1x8x1xf32, #tpu.memory_space<vmem>>, %arg6: memref<1x8x1xf32, #tpu.memory_space<vmem>>, %arg7: memref<1x8x1xf32, #tpu.memory_space<vmem>>) attributes {dimension_semantics = [#tpu.dimension_semantics<parallel>, #tpu.dimension_semantics<parallel>, #tpu.dimension_semantics<arbitrary>], iteration_bounds = array<i64: 2, 1, 1>, scalar_prefetch = 0 : i64, scratch_operands = 0 : i64, tpu.core_type = #tpu.core_type<tc>, window_params = [{transform_indices = @transform_0, window_bounds = array<i64: 8, 128>}, {transform_indices = @transform_1, window_bounds = array<i64: 8, 128>}, {transform_indices = @transform_2, window_bounds = array<i64: 1, 8, 1>}, {transform_indices = @transform_3, window_bounds = array<i64: 1, 8, 1>}, {transform_indices = @transform_4, window_bounds = array<i64: 1, 8, 1>}]} {
    %c0_i32 = arith.constant 0 : i32
    %0 = arith.cmpi eq, %arg2, %c0_i32 : i32
    %1 = arith.extui %0 : i1 to i32
    %c0_i32_0 = arith.constant 0 : i32
    %2 = arith.cmpi ne, %1, %c0_i32_0 : i32
    scf.if %2 {
      %cst_27 = arith.constant 0.000000e+00 : f32
      %45 = vector.broadcast %cst_27 : f32 to vector<8x1xf32>
      %c0_28 = arith.constant 0 : index
      %c0_29 = arith.constant 0 : index
      %c0_30 = arith.constant 0 : index
      %46 = vector.load %arg5[%c0_28, %c0_29, %c0_30] : memref<1x8x1xf32, #tpu.memory_space<vmem>>, vector<1x8x1xf32>
      %47 = vector.shape_cast %46 : vector<1x8x1xf32> to vector<8x1xf32>
      %48 = vector.shape_cast %45 : vector<8x1xf32> to vector<1x8x1xf32>
      tpu.vector_store %arg5[%c0_28, %c0_29, %c0_30], %48 {strides = array<i32>} : memref<1x8x1xf32, #tpu.memory_space<vmem>>, vector<1x8x1xf32>,
      %cst_31 = arith.constant 0.000000e+00 : f32
      %49 = vector.broadcast %cst_31 : f32 to vector<8x1xf32>
      %c0_32 = arith.constant 0 : index
      %c0_33 = arith.constant 0 : index
      %c0_34 = arith.constant 0 : index
      %50 = vector.load %arg6[%c0_32, %c0_33, %c0_34] : memref<1x8x1xf32, #tpu.memory_space<vmem>>, vector<1x8x1xf32>
      %51 = vector.shape_cast %50 : vector<1x8x1xf32> to vector<8x1xf32>
      %52 = vector.shape_cast %49 : vector<8x1xf32> to vector<1x8x1xf32>
      tpu.vector_store %arg6[%c0_32, %c0_33, %c0_34], %52 {strides = array<i32>} : memref<1x8x1xf32, #tpu.memory_space<vmem>>, vector<1x8x1xf32>,
      %cst_35 = arith.constant 0.000000e+00 : f32
      %53 = vector.broadcast %cst_35 : f32 to vector<8x1xf32>
      %c0_36 = arith.constant 0 : index
      %c0_37 = arith.constant 0 : index
      %c0_38 = arith.constant 0 : index
      %54 = vector.load %arg7[%c0_36, %c0_37, %c0_38] : memref<1x8x1xf32, #tpu.memory_space<vmem>>, vector<1x8x1xf32>
      %55 = vector.shape_cast %54 : vector<1x8x1xf32> to vector<8x1xf32>
      %56 = vector.shape_cast %53 : vector<8x1xf32> to vector<1x8x1xf32>
      tpu.vector_store %arg7[%c0_36, %c0_37, %c0_38], %56 {strides = array<i32>} : memref<1x8x1xf32, #tpu.memory_space<vmem>>, vector<1x8x1xf32>,
    } else {
    }
    %c0 = arith.constant 0 : index
    %c0_1 = arith.constant 0 : index
    %3 = vector.load %arg3[%c0, %c0_1] : memref<8x128xf32, #tpu.memory_space<vmem>>, vector<8x128xf32>
    %c0_2 = arith.constant 0 : index
    %c0_3 = arith.constant 0 : index
    %4 = vector.load %arg4[%c0_2, %c0_3] : memref<8x128xf32, #tpu.memory_space<vmem>>, vector<8x128xf32>
    %c1_i32 = arith.constant 1 : i32
    %5 = arith.muli %arg0, %c1_i32 : i32
    %6 = arith.addi %5, %arg2 : i32
    %c128_i32 = arith.constant 128 : i32
    %7 = arith.muli %6, %c128_i32 : i32
    %8 = tpu.iota {dimensions = array<i32: 1>} : vector<8x128xi32>
    %9 = vector.broadcast %7 : i32 to vector<8x128xi32>
    %10 = arith.addi %9, %8 : vector<8x128xi32>
    %c256_i32 = arith.constant 256 : i32
    %11 = vector.broadcast %c256_i32 : i32 to vector<8x128xi32>
    %12 = arith.cmpi slt, %10, %11 : vector<8x128xi32>
    %cst = arith.constant 5.000000e-01 : f32
    %13 = vector.broadcast %cst : f32 to vector<8x128xf32>
    %14 = arith.mulf %13, %3 : vector<8x128xf32>
    %15 = math.tanh %14 : vector<8x128xf32>
    %cst_4 = arith.constant 0.000000e+00 : f32
    %16 = vector.broadcast %cst_4 : f32 to vector<8x128xf32>
    %17 = arith.select %12, %15, %16 : vector<8x128xi1>, vector<8x128xf32>
    %cst_5 = arith.constant 0.000000e+00 : f32
    %18 = vector.broadcast %cst_5 : f32 to vector<8x128xf32>
    %19 = arith.select %12, %4, %18 : vector<8x128xi1>, vector<8x128xf32>
    %c0_6 = arith.constant 0 : index
    %c0_7 = arith.constant 0 : index
    %c0_8 = arith.constant 0 : index
    %20 = vector.load %arg5[%c0_6, %c0_7, %c0_8] : memref<1x8x1xf32, #tpu.memory_space<vmem>>, vector<1x8x1xf32>
    %21 = vector.shape_cast %20 : vector<1x8x1xf32> to vector<8x1xf32>
    %22 = arith.mulf %17, %19 : vector<8x128xf32>
    %cst_9 = arith.constant dense<0.000000e+00> : vector<8xf32>
    %23 = vector.multi_reduction <add>, %22, %cst_9 [1] : vector<8x128xf32> to vector<8xf32>
    %24 = vector.shape_cast %23 : vector<8xf32> to vector<8x1xf32>
    %25 = arith.addf %21, %24 : vector<8x1xf32>
    %c0_10 = arith.constant 0 : index
    %c0_11 = arith.constant 0 : index
    %c0_12 = arith.constant 0 : index
    %26 = vector.load %arg5[%c0_10, %c0_11, %c0_12] : memref<1x8x1xf32, #tpu.memory_space<vmem>>, vector<1x8x1xf32>
    %27 = vector.shape_cast %26 : vector<1x8x1xf32> to vector<8x1xf32>
    %28 = vector.shape_cast %25 : vector<8x1xf32> to vector<1x8x1xf32>
    tpu.vector_store %arg5[%c0_10, %c0_11, %c0_12], %28 {strides = array<i32>} : memref<1x8x1xf32, #tpu.memory_space<vmem>>, vector<1x8x1xf32>,
    %c0_13 = arith.constant 0 : index
    %c0_14 = arith.constant 0 : index
    %c0_15 = arith.constant 0 : index
    %29 = vector.load %arg6[%c0_13, %c0_14, %c0_15] : memref<1x8x1xf32, #tpu.memory_space<vmem>>, vector<1x8x1xf32>
    %30 = vector.shape_cast %29 : vector<1x8x1xf32> to vector<8x1xf32>
    %cst_16 = arith.constant dense<0.000000e+00> : vector<8xf32>
    %31 = vector.multi_reduction <add>, %19, %cst_16 [1] : vector<8x128xf32> to vector<8xf32>
    %32 = vector.shape_cast %31 : vector<8xf32> to vector<8x1xf32>
    %33 = arith.addf %30, %32 : vector<8x1xf32>
    %c0_17 = arith.constant 0 : index
    %c0_18 = arith.constant 0 : index
    %c0_19 = arith.constant 0 : index
    %34 = vector.load %arg6[%c0_17, %c0_18, %c0_19] : memref<1x8x1xf32, #tpu.memory_space<vmem>>, vector<1x8x1xf32>
    %35 = vector.shape_cast %34 : vector<1x8x1xf32> to vector<8x1xf32>
    %36 = vector.shape_cast %33 : vector<8x1xf32> to vector<1x8x1xf32>
    tpu.vector_store %arg6[%c0_17, %c0_18, %c0_19], %36 {strides = array<i32>} : memref<1x8x1xf32, #tpu.memory_space<vmem>>, vector<1x8x1xf32>,
    %c0_20 = arith.constant 0 : index
    %c0_21 = arith.constant 0 : index
    %c0_22 = arith.constant 0 : index
    %37 = vector.load %arg7[%c0_20, %c0_21, %c0_22] : memref<1x8x1xf32, #tpu.memory_space<vmem>>, vector<1x8x1xf32>
    %38 = vector.shape_cast %37 : vector<1x8x1xf32> to vector<8x1xf32>
    %cst_23 = arith.constant dense<0.000000e+00> : vector<8xf32>
    %39 = vector.multi_reduction <add>, %17, %cst_23 [1] : vector<8x128xf32> to vector<8xf32>
    %40 = vector.shape_cast %39 : vector<8xf32> to vector<8x1xf32>
    %41 = arith.addf %38, %40 : vector<8x1xf32>
    %c0_24 = arith.constant 0 : index
    %c0_25 = arith.constant 0 : index
    %c0_26 = arith.constant 0 : index
    %42 = vector.load %arg7[%c0_24, %c0_25, %c0_26] : memref<1x8x1xf32, #tpu.memory_space<vmem>>, vector<1x8x1xf32>
    %43 = vector.shape_cast %42 : vector<1x8x1xf32> to vector<8x1xf32>
    %44 = vector.shape_cast %41 : vector<8x1xf32> to vector<1x8x1xf32>
    tpu.vector_store %arg7[%c0_24, %c0_25, %c0_26], %44 {strides = array<i32>} : memref<1x8x1xf32, #tpu.memory_space<vmem>>, vector<1x8x1xf32>,
    return
  }
  func.func @transform_0(%arg0: i32, %arg1: i32, %arg2: i32) -> (i32, i32) {
    %c1_i32 = arith.constant 1 : i32
    %0 = arith.muli %arg0, %c1_i32 : i32
    %1 = arith.addi %0, %arg2 : i32
    %c1_i32_0 = arith.constant 1 : i32
    %2 = arith.minsi %1, %c1_i32_0 : i32
    %c0_i32 = arith.constant 0 : i32
    return %arg1, %2 : i32, i32
  }
  func.func @transform_1(%arg0: i32, %arg1: i32, %arg2: i32) -> (i32, i32) {
    %c1_i32 = arith.constant 1 : i32
    %0 = arith.muli %arg0, %c1_i32 : i32
    %1 = arith.addi %0, %arg2 : i32
    %c1_i32_0 = arith.constant 1 : i32
    %2 = arith.minsi %1, %c1_i32_0 : i32
    %c0_i32 = arith.constant 0 : i32
    return %arg1, %2 : i32, i32
  }
  func.func @transform_2(%arg0: i32, %arg1: i32, %arg2: i32) -> (i32, i32, i32) {
    %c0_i32 = arith.constant 0 : i32
    %c0_i32_0 = arith.constant 0 : i32
    return %arg0, %arg1, %c0_i32 : i32, i32, i32
  }
  func.func @transform_3(%arg0: i32, %arg1: i32, %arg2: i32) -> (i32, i32, i32) {
    %c0_i32 = arith.constant 0 : i32
    %c0_i32_0 = arith.constant 0 : i32
    return %arg0, %arg1, %c0_i32 : i32, i32, i32
  }
  func.func @transform_4(%arg0: i32, %arg1: i32, %arg2: i32) -> (i32, i32, i32) {
    %c0_i32 = arith.constant 0 : i32
    %c0_i32_0 = arith.constant 0 : i32
    return %arg0, %arg1, %c0_i32 : i32, i32, i32
  }
}

</mosaic_0001>

<llo_original>
// kernel: dice_loss.1
$region0: #{dice_loss.1}
  #allocation0 [shape = 'u32[]', space=smem, size = 0x4, offset = 0x4, fixed_abs, tag = 'smem constant byte address 0x4 - core index']
  #allocation1 [shape = 'u32[144,128]{1,0:T(1,128)}', space=vmem, size = 0x12000, scoped, tag = 'internal scratch']
  %s0 = inlined_call_operand.vmem [shape: f32[8,256], index: 0, kind: input, shape index: {}]
  %s1 = inlined_call_operand.vmem [shape: f32[8,256], index: 1, kind: input, shape index: {}]
  %s2 = inlined_call_operand.vmem [shape: f32[2,8,1], index: 2, kind: output, shape index: {0}]
  %s3 = inlined_call_operand.vmem [shape: f32[2,8,1], index: 3, kind: output, shape index: {1}]
  %s4 = inlined_call_operand.vmem [shape: f32[2,8,1], index: 4, kind: output, shape index: {2}]
  %5 = xla_tuple %s2, %s3, %s4
  %s6 = sld [smem:[#allocation0]]
  $region61: #{dice_loss.1} parent=0
    _
  %s8 = ssub.s32 1, %s6
  %s9 = scalar_select 0, %s8, %s6
  loop: start=0, step=1, limit=4
  $region2: #{dice_loss.1} parent=0 // loop_pre_header
    _
  $region3: #{dice_loss.1} parent=0 // loop_header
    %s11 = sphi 0, %s15
    %p12 = scmp.ge.s32.totalorder %s11, 4
    %s18 = sphi 0, %s37
    %s19 = sphi 0, %s33
    %s20 = sphi 0, %s29
    %s21 = sphi 0, %s18
    %s22 = sphi 0, %s19
    %s23 = sphi 0, %s20
    %s24 = sphi 0, %s21
    %s25 = sphi 0, %s22
    %s26 = sphi 0, %s23
    %s48 = sphi 0, %s50
    %s51 = sphi 0, %s48
    %s52 = sphi 0, %s51
    %s68 = sphi 0, %s52
    %s82 = sphi 0, %s84
    %s85 = sphi 0, %s82
    %s86 = sphi 0, %s85
    %s102 = sphi 0, %s86
    %s110 = sphi 0, %s112
    %s113 = sphi 0, %s110
    %s114 = sphi 0, %s113
    %s130 = sphi 0, %s114
    %s138 = sphi 0, %s140
    %s141 = sphi 0, %s138
    %s142 = sphi 0, %s141
    %s158 = sphi 0, %s142
    %s166 = sphi 0, %s168
    %s169 = sphi 0, %s166
    %s170 = sphi 0, %s169
    %s186 = sphi 0, %s170
  $region4: #{dice_loss.1} parent=0 // loop_header_branch
    %14 = sbr.rel (%p12) target = $region8
  $region5: #{dice_loss.1} parent=0 // loop_body
    %s16 = ssub.s32 %s11, 1
    %s17 = ssub.s32 %s11, 2
    %s27 = sadd.s32 1, %s20
    %p28 = scmp.ge.s32.totalorder %s27, 1
    %s29 = scalar_select %p28, 0, %s27
    %s30 = sadd.s32 1, %s19
    %s31 = scalar_select %p28, %s30, %s19
    %p32 = scmp.ge.s32.totalorder %s31, 1
    %s33 = scalar_select %p32, 0, %s31
    %s34 = sadd.s32 1, %s18
    %s35 = scalar_select %p32, %s34, %s18
    %p36 = scmp.ge.s32.totalorder %s35, 2
    %s37 = scalar_select %p36, 0, %s35
    %s38 = sadd.s32 %s18, %s20
    %p39 = scmp.lt.s32.totalorder %s38, 1
    %s40 = scalar_select %p39, %s38, 1
    %s41 = sadd.s32 %s37, %s29
    %p42 = scmp.lt.s32.totalorder %s41, 1
    %s43 = scalar_select %p42, %s41, 1
    %s44 = ssub.s32 %s19, %s33
    %s45 = ssub.s32 %s40, %s43
    %s46 = sor.u32 %s44, %s45
    %p47 = scmp.eq.s32.totalorder %s46, 0
    %s49 = sadd.s32 %s48, 1
    %s50 = scalar_select %p47, %s48, %s49
    %p53 = pneg %p47
    %p54 = scmp.eq.s32.totalorder %s11, 1
    %p55 = por %p53, %p54
    %p56 = scmp.ne.s32.totalorder %s48, %s51
    %p57 = scmp.eq.s32.totalorder %s11, 0
    %p58 = por %p56, %p57
    %p59 = scmp.ne.s32.totalorder %s48, %s51
    %p60 = scmp.eq.s32.totalorder %s16, 1
    %p61 = por %p59, %p60
    %p62 = scmp.ne.s32.totalorder %s51, %s52
    %p63 = scmp.eq.s32.totalorder %s16, 0
    %p64 = por %p62, %p63
    %p65 = scmp.ne.s32.totalorder %s51, %s52
    %p66 = scmp.eq.s32.totalorder %s17, 1
    %p67 = por %p65, %p66
    %p69 = scmp.ne.s32.totalorder %s52, %s68
    %p70 = scmp.eq.s32.totalorder %s17, 0
    %p71 = por %p69, %p70
    %s72 = sadd.s32 %s18, %s20
    %p73 = scmp.lt.s32.totalorder %s72, 1
    %s74 = scalar_select %p73, %s72, 1
    %s75 = sadd.s32 %s37, %s29
    %p76 = scmp.lt.s32.totalorder %s75, 1
    %s77 = scalar_select %p76, %s75, 1
    %s78 = ssub.s32 %s19, %s33
    %s79 = ssub.s32 %s74, %s77
    %s80 = sor.u32 %s78, %s79
    %p81 = scmp.eq.s32.totalorder %s80, 0
    %s83 = sadd.s32 %s82, 1
    %s84 = scalar_select %p81, %s82, %s83
    %p87 = pneg %p81
    %p88 = scmp.eq.s32.totalorder %s11, 1
    %p89 = por %p87, %p88
    %p90 = scmp.ne.s32.totalorder %s82, %s85
    %p91 = scmp.eq.s32.totalorder %s11, 0
    %p92 = por %p90, %p91
    %p93 = scmp.ne.s32.totalorder %s82, %s85
    %p94 = scmp.eq.s32.totalorder %s16, 1
    %p95 = por %p93, %p94
    %p96 = scmp.ne.s32.totalorder %s85, %s86
    %p97 = scmp.eq.s32.totalorder %s16, 0
    %p98 = por %p96, %p97
    %p99 = scmp.ne.s32.totalorder %s85, %s86
    %p100 = scmp.eq.s32.totalorder %s17, 1
    %p101 = por %p99, %p100
    %p103 = scmp.ne.s32.totalorder %s86, %s102
    %p104 = scmp.eq.s32.totalorder %s17, 0
    %p105 = por %p103, %p104
    %s106 = ssub.s32 %s18, %s37
    %s107 = ssub.s32 %s19, %s33
    %s108 = sor.u32 %s106, %s107
    %p109 = scmp.eq.s32.totalorder %s108, 0
    %s111 = sadd.s32 %s110, 1
    %s112 = scalar_select %p109, %s110, %s111
    %p115 = pneg %p109
    %p116 = scmp.eq.s32.totalorder %s11, 1
    %p117 = por %p115, %p116
    %p118 = scmp.ne.s32.totalorder %s110, %s113
    %p119 = scmp.eq.s32.totalorder %s11, 0
    %p120 = por %p118, %p119
    %p121 = scmp.ne.s32.totalorder %s110, %s113
    %p122 = scmp.eq.s32.totalorder %s16, 1
    %p123 = por %p121, %p122
    %p124 = scmp.ne.s32.totalorder %s113, %s114
    %p125 = scmp.eq.s32.totalorder %s16, 0
    %p126 = por %p124, %p125
    %p127 = scmp.ne.s32.totalorder %s113, %s114
    %p128 = scmp.eq.s32.totalorder %s17, 1
    %p129 = por %p127, %p128
    %p131 = scmp.ne.s32.totalorder %s114, %s130
    %p132 = scmp.eq.s32.totalorder %s17, 0
    %p133 = por %p131, %p132
    %s134 = ssub.s32 %s18, %s37
    %s135 = ssub.s32 %s19, %s33
    %s136 = sor.u32 %s134, %s135
    %p137 = scmp.eq.s32.totalorder %s136, 0
    %s139 = sadd.s32 %s138, 1
    %s140 = scalar_select %p137, %s138, %s139
    %p143 = pneg %p137
    %p144 = scmp.eq.s32.totalorder %s11, 1
    %p145 = por %p143, %p144
    %p146 = scmp.ne.s32.totalorder %s138, %s141
    %p147 = scmp.eq.s32.totalorder %s11, 0
    %p148 = por %p146, %p147
    %p149 = scmp.ne.s32.totalorder %s138, %s141
    %p150 = scmp.eq.s32.totalorder %s16, 1
    %p151 = por %p149, %p150
    %p152 = scmp.ne.s32.totalorder %s141, %s142
    %p153 = scmp.eq.s32.totalorder %s16, 0
    %p154 = por %p152, %p153
    %p155 = scmp.ne.s32.totalorder %s141, %s142
    %p156 = scmp.eq.s32.totalorder %s17, 1
    %p157 = por %p155, %p156
    %p159 = scmp.ne.s32.totalorder %s142, %s158
    %p160 = scmp.eq.s32.totalorder %s17, 0
    %p161 = por %p159, %p160
    %s162 = ssub.s32 %s18, %s37
    %s163 = ssub.s32 %s19, %s33
    %s164 = sor.u32 %s162, %s163
    %p165 = scmp.eq.s32.totalorder %s164, 0
    %s167 = sadd.s32 %s166, 1
    %s168 = scalar_select %p165, %s166, %s167
    %p171 = pneg %p165
    %p172 = scmp.eq.s32.totalorder %s11, 1
    %p173 = por %p171, %p172
    %p174 = scmp.ne.s32.totalorder %s166, %s169
    %p175 = scmp.eq.s32.totalorder %s11, 0
    %p176 = por %p174, %p175
    %p177 = scmp.ne.s32.totalorder %s166, %s169
    %p178 = scmp.eq.s32.totalorder %s16, 1
    %p179 = por %p177, %p178
    %p180 = scmp.ne.s32.totalorder %s169, %s170
    %p181 = scmp.eq.s32.totalorder %s16, 0
    %p182 = por %p180, %p181
    %p183 = scmp.ne.s32.totalorder %s169, %s170
    %p184 = scmp.eq.s32.totalorder %s17, 1
    %p185 = por %p183, %p184
    %p187 = scmp.ne.s32.totalorder %s170, %s186
    %p188 = scmp.eq.s32.totalorder %s17, 0
    %p189 = por %p187, %p188
    %p190 = scmp.le.s32.totalorder 1, %s11
    %p191 = scmp.lt.s32.totalorder %s11, 3
    %p192 = pnand %p190, %p191
    %p193 = pneg %p192
    // Predicated region
    $region9: #{dice_loss.1} parent=5 // pred_check
      _
    $region10: #{dice_loss.1} parent=5 // pred_check_branch
      %195 = sbr.rel (%p192) target = $region12
    $region11: #{dice_loss.1} parent=5 // pred_region
      %s196 = ssub.s32 %s11, 1
    $region12: #{dice_loss.1} parent=5 // pred_fallthru
      _
    %p197 = scmp.lt.s32.totalorder %s11, 2
    // Predicated region
    $region13: #{dice_loss.1} parent=5 // pred_check
      %p198 = pneg %p197
    $region14: #{dice_loss.1} parent=5 // pred_check_branch
      %200 = sbr.rel (%p198) target = $region16
    $region15: #{dice_loss.1} parent=5 // pred_region
      // Predicated region
      $region17: #{dice_loss.1} parent=15 // pred_check
        %p201 = pneg %p58
      $region18: #{dice_loss.1} parent=15 // pred_check_branch
        %203 = sbr.rel (%p201) target = $region20
      $region19: #{dice_loss.1} parent=15 // pred_region
        %s204 = sadd.s32 %s18, %s20
        %p205 = scmp.lt.s32.totalorder %s204, 1
        %s206 = scalar_select %p205, %s204, 1
        %p207 = scmp.lt.s32.totalorder %s19, 0
        %s208 = scalar_select %p207, %s19, 0
        %p209 = scmp.lt.s32.totalorder %s206, 1
        %s210 = scalar_select %p209, %s206, 1
        %s211 = smul.addr %s208, 2
        %s212 = sadd.s32 %s210, %s211
        %s213 = smul.addr %s212, 8
        %s214 = scalar_lea.vmem %s0, %s213
        %s215 = sadd.s32 %s18, %s20
        %p216 = scmp.lt.s32.totalorder %s215, 1
        %s217 = scalar_select %p216, %s215, 1
      $region20: #{dice_loss.1} parent=15 // pred_fallthru
        _
      // Predicated region
      $region21: #{dice_loss.1} parent=15 // pred_check
        %p218 = pneg %p92
      $region22: #{dice_loss.1} parent=15 // pred_check_branch
        %220 = sbr.rel (%p218) target = $region24
      $region23: #{dice_loss.1} parent=15 // pred_region
        %s221 = sadd.s32 %s18, %s20
        %p222 = scmp.lt.s32.totalorder %s221, 1
        %s223 = scalar_select %p222, %s221, 1
        %p224 = scmp.lt.s32.totalorder %s19, 0
        %s225 = scalar_select %p224, %s19, 0
        %p226 = scmp.lt.s32.totalorder %s223, 1
        %s227 = scalar_select %p226, %s223, 1
        %s228 = smul.addr %s225, 2
        %s229 = sadd.s32 %s227, %s228
        %s230 = smul.addr %s229, 8
        %s231 = scalar_lea.vmem %s1, %s230
        %s232 = sadd.s32 %s18, %s20
        %p233 = scmp.lt.s32.totalorder %s232, 1
        %s234 = scalar_select %p233, %s232, 1
      $region24: #{dice_loss.1} parent=15 // pred_fallthru
        _
    $region16: #{dice_loss.1} parent=5 // pred_fallthru
      _
    %p235 = scmp.le.s32.totalorder 1, %s11
    %p236 = scmp.lt.s32.totalorder %s11, 3
    %p237 = pnand %p235, %p236
    %p238 = pneg %p237
    // Predicated region
    $region25: #{dice_loss.1} parent=5 // pred_check
      _
    $region26: #{dice_loss.1} parent=5 // pred_check_branch
      %240 = sbr.rel (%p237) target = $region28
    $region27: #{dice_loss.1} parent=5 // pred_region
      %s241 = ssub.s32 %s11, 1
      %s242 = sadd.s32 %s21, %s23
      %p243 = scmp.lt.s32.totalorder %s242, 1
      %s244 = scalar_select %p243, %s242, 1
      %p245 = scmp.lt.s32.totalorder %s22, 0
      %s246 = scalar_select %p245, %s22, 0
      %p247 = scmp.lt.s32.totalorder %s244, 1
      %s248 = scalar_select %p247, %s244, 1
      %s249 = smul.addr %s246, 2
      %s250 = sadd.s32 %s248, %s249
      %s251 = smul.addr %s250, 8
      %s252 = scalar_lea.vmem %s0, %s251
      %p253 = pneg %p64
      %p254 = pneg %p61
      %s255 = sadd.s32 %s21, %s23
      %p256 = scmp.lt.s32.totalorder %s255, 1
      %s257 = scalar_select %p256, %s255, 1
      %p258 = scmp.lt.s32.totalorder %s22, 0
      %s259 = scalar_select %p258, %s22, 0
      %p260 = scmp.lt.s32.totalorder %s257, 1
      %s261 = scalar_select %p260, %s257, 1
      %s262 = smul.addr %s259, 2
      %s263 = sadd.s32 %s261, %s262
      %s264 = smul.addr %s263, 8
      %s265 = scalar_lea.vmem %s1, %s264
      %p266 = pneg %p98
      %p267 = pneg %p95
      %p268 = pneg %p126
      %p269 = pneg %p123
      %p270 = scmp.lt.s32.totalorder %s21, 1
      %s271 = scalar_select %p270, %s21, 1
      %p272 = scmp.lt.s32.totalorder %s22, 0
      %s273 = scalar_select %p272, %s22, 0
      %s274 = sadd.s32 %s273, %s271
      %s275 = smul.addr %s274, 8
      %s276 = scalar_lea.vmem %s2, %s275
      %p277 = pneg %p154
      %p278 = pneg %p151
      %p279 = scmp.lt.s32.totalorder %s21, 1
      %s280 = scalar_select %p279, %s21, 1
      %p281 = scmp.lt.s32.totalorder %s22, 0
      %s282 = scalar_select %p281, %s22, 0
      %s283 = sadd.s32 %s282, %s280
      %s284 = smul.addr %s283, 8
      %s285 = scalar_lea.vmem %s3, %s284
      %p286 = pneg %p182
      %p287 = pneg %p179
      %p288 = scmp.lt.s32.totalorder %s21, 1
      %s289 = scalar_select %p288, %s21, 1
      %p290 = scmp.lt.s32.totalorder %s22, 0
      %s291 = scalar_select %p290, %s22, 0
      %s292 = sadd.s32 %s291, %s289
      %s293 = smul.addr %s292, 8
      %s294 = scalar_lea.vmem %s4, %s293
      %s295 = sadd.s32 %s21, %s23
      %p296 = scmp.lt.s32.totalorder %s295, 1
      %s297 = scalar_select %p296, %s295, 1
      %p298 = scmp.lt.s32.totalorder %s22, 0
      %s299 = scalar_select %p298, %s22, 0
      %p300 = scmp.lt.s32.totalorder %s297, 1
      %s301 = scalar_select %p300, %s297, 1
      %s302 = smul.addr %s299, 2
      %s303 = sadd.s32 %s301, %s302
      %s304 = smul.addr %s303, 8
      %s305 = scalar_lea.vmem %s0, %s304
      %s306 = sadd.s32 %s21, %s23
      %p307 = scmp.lt.s32.totalorder %s306, 1
      %s308 = scalar_select %p307, %s306, 1
      %s309 = sadd.s32 %s21, %s23
      %p310 = scmp.lt.s32.totalorder %s309, 1
      %s311 = scalar_select %p310, %s309, 1
      %p312 = scmp.lt.s32.totalorder %s22, 0
      %s313 = scalar_select %p312, %s22, 0
      %p314 = scmp.lt.s32.totalorder %s311, 1
      %s315 = scalar_select %p314, %s311, 1
      %s316 = smul.addr %s313, 2
      %s317 = sadd.s32 %s315, %s316
      %s318 = smul.addr %s317, 8
      %s319 = scalar_lea.vmem %s1, %s318
      %s320 = sadd.s32 %s21, %s23
      %p321 = scmp.lt.s32.totalorder %s320, 1
      %s322 = scalar_select %p321, %s320, 1
      %p323 = scmp.lt.s32.totalorder %s21, 1
      %s324 = scalar_select %p323, %s21, 1
      %p325 = scmp.lt.s32.totalorder %s22, 0
      %s326 = scalar_select %p325, %s22, 0
      %s327 = sadd.s32 %s326, %s324
      %s328 = smul.addr %s327, 8
      %s329 = scalar_lea.vmem %s2, %s328
      %p330 = scmp.lt.s32.totalorder %s21, 1
      %s331 = scalar_select %p330, %s21, 1
      %p332 = scmp.lt.s32.totalorder %s22, 0
      %s333 = scalar_select %p332, %s22, 0
      %s334 = sadd.s32 %s333, %s331
      %s335 = smul.addr %s334, 8
      %s336 = scalar_lea.vmem %s3, %s335
      %p337 = scmp.lt.s32.totalorder %s21, 1
      %s338 = scalar_select %p337, %s21, 1
      %p339 = scmp.lt.s32.totalorder %s22, 0
      %s340 = scalar_select %p339, %s22, 0
      %s341 = sadd.s32 %s340, %s338
      %s342 = smul.addr %s341, 8
      %s343 = scalar_lea.vmem %s4, %s342
      %p344 = scmp.eq.s32.totalorder %s23, 0
      // Predicated region
      $region29: #{dice_loss.1} parent=27 // pred_check
        %p345 = pneg %p344
      $region30: #{dice_loss.1} parent=27 // pred_check_branch
        %347 = sbr.rel (%p345) target = $region32
      $region31: #{dice_loss.1} parent=27 // pred_region
        %vm348 = vcmask 7168
        %349 = vst.msk [vmem:[%s329] sm:$0xff] %vm348, 0.0
        %350 = vst.msk [vmem:[%s336] sm:$0xff] %vm348, 0.0
        %351 = vst.msk [vmem:[%s343] sm:$0xff] %vm348, 0.0
      $region32: #{dice_loss.1} parent=27 // pred_fallthru
        _
      %v352 = vld [vmem:[%s305] sm:$0xff]
      %v353 = vld [vmem:[%s319] sm:$0xff]
      %s354 = sadd.s32 %s21, %s23
      %s355 = smul.u32 %s354, 128
      %v356 = vlaneseq
      %v357 = vand.u32 %v356, 127
      %v358 = vstv %s355
      %v359 = vadd.s32 %v358, %v357
      %vm360 = vcmp.lt.s32.totalorder %v359, 256
      %v361 = vmul.f32 %v352, 0.5
      %v362 = vtanh.pop %v361
      %v363 = vsel %vm360, %v362, 0.0
      %v364 = vsel %vm360, %v353, 0.0
      %v365 = vld [vmem:[%s329] sm:$0xff]
      %v366 = vmul.f32 %v363, %v364
      %367 = vadd.xlane.f32.xlu0 %v366
      %v368 = vpop.xlane.xlu0 %367
      %v369 = vadd.f32 %v365, %v368
      %vm370 = vcmask 7168
      %371 = vst.msk [vmem:[%s329] sm:$0xff] %vm370, %v369
      %v372 = vld [vmem:[%s336] sm:$0xff]
      %373 = vadd.xlane.f32.xlu0 %v364
      %v374 = vpop.xlane.xlu0 %373
      %v375 = vadd.f32 %v372, %v374
      %376 = vst.msk [vmem:[%s336] sm:$0xff] %vm370, %v375
      %v377 = vld [vmem:[%s343] sm:$0xff]
      %378 = vadd.xlane.f32.xlu0 %v363
      %v379 = vpop.xlane.xlu0 %378
      %v380 = vadd.f32 %v377, %v379
      %381 = vst.msk [vmem:[%s343] sm:$0xff] %vm370, %v380
      %p382 = scmp.lt.s32.totalorder %s21, 1
      %s383 = scalar_select %p382, %s21, 1
      %p384 = scmp.lt.s32.totalorder %s22, 0
      %s385 = scalar_select %p384, %s22, 0
      %s386 = sadd.s32 %s385, %s383
      %s387 = smul.addr %s386, 8
      %s388 = scalar_lea.vmem %s2, %s387
      %p389 = scmp.lt.s32.totalorder %s21, 1
      %s390 = scalar_select %p389, %s21, 1
      %p391 = scmp.lt.s32.totalorder %s22, 0
      %s392 = scalar_select %p391, %s22, 0
      %s393 = sadd.s32 %s392, %s390
      %s394 = smul.addr %s393, 8
      %s395 = scalar_lea.vmem %s3, %s394
      %p396 = scmp.lt.s32.totalorder %s21, 1
      %s397 = scalar_select %p396, %s21, 1
      %p398 = scmp.lt.s32.totalorder %s22, 0
      %s399 = scalar_select %p398, %s22, 0
      %s400 = sadd.s32 %s399, %s397
      %s401 = smul.addr %s400, 8
      %s402 = scalar_lea.vmem %s4, %s401
      // Predicated region
      $region33: #{dice_loss.1} parent=27 // pred_check
        %p403 = pneg %p123
      $region34: #{dice_loss.1} parent=27 // pred_check_branch
        %405 = sbr.rel (%p403) target = $region36
      $region35: #{dice_loss.1} parent=27 // pred_region
        _
      $region36: #{dice_loss.1} parent=27 // pred_fallthru
        _
      // Predicated region
      $region37: #{dice_loss.1} parent=27 // pred_check
        %p406 = pneg %p151
      $region38: #{dice_loss.1} parent=27 // pred_check_branch
        %408 = sbr.rel (%p406) target = $region40
      $region39: #{dice_loss.1} parent=27 // pred_region
        _
      $region40: #{dice_loss.1} parent=27 // pred_fallthru
        _
      // Predicated region
      $region41: #{dice_loss.1} parent=27 // pred_check
        %p409 = pneg %p179
      $region42: #{dice_loss.1} parent=27 // pred_check_branch
        %411 = sbr.rel (%p409) target = $region44
      $region43: #{dice_loss.1} parent=27 // pred_region
        _
      $region44: #{dice_loss.1} parent=27 // pred_fallthru
        _
    $region28: #{dice_loss.1} parent=5 // pred_fallthru
      _
    %p412 = scmp.le.s32.totalorder 2, %s11
    // Predicated region
    $region45: #{dice_loss.1} parent=5 // pred_check
      %p413 = pneg %p412
    $region46: #{dice_loss.1} parent=5 // pred_check_branch
      %415 = sbr.rel (%p413) target = $region48
    $region47: #{dice_loss.1} parent=5 // pred_region
      %s416 = ssub.s32 %s11, 2
      // Predicated region
      $region49: #{dice_loss.1} parent=47 // pred_check
        %p417 = pneg %p129
      $region50: #{dice_loss.1} parent=47 // pred_check_branch
        %419 = sbr.rel (%p417) target = $region52
      $region51: #{dice_loss.1} parent=47 // pred_region
        %p420 = scmp.lt.s32.totalorder %s24, 1
        %s421 = scalar_select %p420, %s24, 1
        %p422 = scmp.lt.s32.totalorder %s25, 0
        %s423 = scalar_select %p422, %s25, 0
        %s424 = sadd.s32 %s423, %s421
        %s425 = smul.addr %s424, 8
        %s426 = scalar_lea.vmem %s2, %s425
      $region52: #{dice_loss.1} parent=47 // pred_fallthru
        _
      // Predicated region
      $region53: #{dice_loss.1} parent=47 // pred_check
        %p427 = pneg %p157
      $region54: #{dice_loss.1} parent=47 // pred_check_branch
        %429 = sbr.rel (%p427) target = $region56
      $region55: #{dice_loss.1} parent=47 // pred_region
        %p430 = scmp.lt.s32.totalorder %s24, 1
        %s431 = scalar_select %p430, %s24, 1
        %p432 = scmp.lt.s32.totalorder %s25, 0
        %s433 = scalar_select %p432, %s25, 0
        %s434 = sadd.s32 %s433, %s431
        %s435 = smul.addr %s434, 8
        %s436 = scalar_lea.vmem %s3, %s435
      $region56: #{dice_loss.1} parent=47 // pred_fallthru
        _
      // Predicated region
      $region57: #{dice_loss.1} parent=47 // pred_check
        %p437 = pneg %p185
      $region58: #{dice_loss.1} parent=47 // pred_check_branch
        %439 = sbr.rel (%p437) target = $region60
      $region59: #{dice_loss.1} parent=47 // pred_region
        %p440 = scmp.lt.s32.totalorder %s24, 1
        %s441 = scalar_select %p440, %s24, 1
        %p442 = scmp.lt.s32.totalorder %s25, 0
        %s443 = scalar_select %p442, %s25, 0
        %s444 = sadd.s32 %s443, %s441
        %s445 = smul.addr %s444, 8
        %s446 = scalar_lea.vmem %s4, %s445
      $region60: #{dice_loss.1} parent=47 // pred_fallthru
        _
    $region48: #{dice_loss.1} parent=5 // pred_fallthru
      _
  $region6: #{dice_loss.1} parent=0 // loop_footer
    %s15 = sadd.s32 1, %s11
  $region7: #{dice_loss.1} parent=0 // loop_footer_branch
    %10 = sbr.rel target = $region3
  $region8: #{dice_loss.1} parent=0 // loop_exit
    _

</llo_original>
